<compile_context>
chip_gen: v6e
topology: v6e:2x2x1
jax: 0.10.0
libtpu: 0.0.40
codegen_flags: <defaults>
</compile_context>

<pallas_src>
import functools

import jax
import jax.numpy as jnp
from jax.experimental import pallas as pl
from jax.experimental.pallas import tpu as pltpu

STATE_SIZE = 32       # Normalizer(state_size).size
N_FEATURES = 4        # cfg['history_features']
EPS = 1e-2            # variance floor & initial count
CLIP = 5.0            # normalize clip range

_LANES = 128
_SUBLANES = 8
_ROW_TILE = 1024              # folded rows per block -> (1024, 128) f32 = 512 KiB
_STATS_CORES = 2              # shard the stats reduction across v7x's 2 TensorCores
_FUSED_MAX_X_BYTES = 4 << 20  # whole-x-resident fused path gate (v7x-safe)


def _round_up(x, m):
    return ((x + m - 1) // m) * m


def _fold_factor(d):
    # How many feature rows fit side-by-side on the 128-lane axis.
    return _LANES // d if (d <= _LANES and _LANES % d == 0) else 1


def _pad_rows_and_fold(x2d, fold, padded_n4):
    n, d = x2d.shape
    padded_n = padded_n4 * fold
    if padded_n != n:
        x2d = jnp.pad(x2d, ((0, padded_n - n), (0, 0)))   # zero rows: no effect on sums
    return x2d.reshape(padded_n4, fold * d)


# ---------------------------------------------------------------------------
# Fused single-call kernel: stats + mean/var/rsqrt + normalize, x read once.
# Used when the (padded, folded) x fits comfortably in VMEM.
# ---------------------------------------------------------------------------
def _fused_kernel(x_ref, rsum_ref, rsq_ref, cnt_ref,
                  o_ref, nsum_ref, nsq_ref, *, fold, d):
    x = x_ref[...].astype(jnp.float32)
    rows, dl = x.shape
    xs = x.reshape(rows // _SUBLANES, _SUBLANES, dl)
    part_s = jnp.sum(xs, axis=0)            # (8, dl)  VPU-only vreg adds
    part_q = jnp.sum(xs * xs, axis=0)       # (8, dl)
    # Combine the `fold` interleaved d-lane groups with cyclic lane rolls (XLU, once).
    comb_s, comb_q = part_s, part_q
    for k in range(1, fold):
        comb_s = comb_s + pltpu.roll(part_s, shift=k * d, axis=1)
        comb_q = comb_q + pltpu.roll(part_q, shift=k * d, axis=1)
    tot_s = jnp.sum(comb_s, axis=0, keepdims=True) + rsum_ref[...]   # (1, dl)
    tot_q = jnp.sum(comb_q, axis=0, keepdims=True) + rsq_ref[...]
    inv_n = 1.0 / cnt_ref[0]
    mean = tot_s * inv_n
    var = jnp.maximum(tot_q * inv_n - mean * mean, jnp.float32(EPS * EPS))
    inv_std = jax.lax.rsqrt(var)            # EUP slot, effectively free
    y = (x - mean) * inv_std
    o_ref[...] = jnp.clip(y, -CLIP, CLIP).astype(o_ref.dtype)
    nsum_ref[...] = tot_s
    nsq_ref[...] = tot_q


def _fused_forward(x2d, r_sum, r_sumsq, new_count, fold, dl, padded_n4):
    n, d = x2d.shape
    xf = _pad_rows_and_fold(x2d, fold, padded_n4)
    rs = jnp.tile(r_sum.astype(jnp.float32), fold).reshape(1, dl)
    rq = jnp.tile(r_sumsq.astype(jnp.float32), fold).reshape(1, dl)
    cnt = jnp.reshape(new_count, (1,)).astype(jnp.float32)

    y_pad, new_s, new_q = pl.pallas_call(
        functools.partial(_fused_kernel, fold=fold, d=d),
        out_shape=(jax.ShapeDtypeStruct((padded_n4, dl), x2d.dtype),
                   jax.ShapeDtypeStruct((1, dl), jnp.float32),
                   jax.ShapeDtypeStruct((1, dl), jnp.float32)),
        in_specs=[pl.BlockSpec(memory_space=pltpu.MemorySpace.VMEM),
                  pl.BlockSpec(memory_space=pltpu.MemorySpace.VMEM),
                  pl.BlockSpec(memory_space=pltpu.MemorySpace.VMEM),
                  pl.BlockSpec(memory_space=pltpu.MemorySpace.SMEM)],
        out_specs=(pl.BlockSpec(memory_space=pltpu.MemorySpace.VMEM),
                   pl.BlockSpec(memory_space=pltpu.MemorySpace.VMEM),
                   pl.BlockSpec(memory_space=pltpu.MemorySpace.VMEM)),
        compiler_params=pltpu.CompilerParams(vmem_limit_bytes=32 << 20),
    )(xf, rs, rq, cnt)

    y = y_pad.reshape(-1, d)[:n]
    return y, new_s[0, :d], new_q[0, :d]


# ---------------------------------------------------------------------------
# Two-pass path for large inputs: tiled stats kernel + tiled normalize kernel.
# ---------------------------------------------------------------------------
def _stats_kernel(x_ref, sum_ref, sq_ref):
    @pl.when(pl.program_id(1) == 0)
    def _():
        sum_ref[...] = jnp.zeros_like(sum_ref)
        sq_ref[...] = jnp.zeros_like(sq_ref)

    x = x_ref[...].astype(jnp.float32)
    rows, dl = x.shape
    xs = x.reshape(rows // _SUBLANES, _SUBLANES, dl)
    # VPU-only accumulation into an (8, dl) resident partial; the XLU sublane /
    # group reduction happens once on the tiny output in the JAX epilogue.
    sum_ref[...] += jnp.sum(xs, axis=0)
    sq_ref[...] += jnp.sum(xs * xs, axis=0)


def _normalize_kernel(x_ref, mean_ref, inv_ref, o_ref):
    x = x_ref[...].astype(jnp.float32)
    y = (x - mean_ref[...]) * inv_ref[...]
    o_ref[...] = jnp.clip(y, -CLIP, CLIP).astype(o_ref.dtype)


def _two_pass_forward(x2d, r_sum, r_sumsq, new_count, fold, dl):
    n, d = x2d.shape
    n4 = -(-n // fold)
    if n4 <= _ROW_TILE:
        row_tile = _round_up(n4, _SUBLANES)
        total_tiles = 1
    else:
        row_tile = _ROW_TILE
        total_tiles = -(-n4 // row_tile)
    stats_cores = _STATS_CORES if total_tiles >= _STATS_CORES else 1
    total_tiles = _round_up(total_tiles, stats_cores)
    tiles_per_core = total_tiles // stats_cores
    padded_n4 = total_tiles * row_tile

    xf = _pad_rows_and_fold(x2d, fold, padded_n4)

    # Pass 1: per-feature partial sums (2 per-core partials on v7x, 1 otherwise).
    s_part, q_part = pl.pallas_call(
        _stats_kernel,
        out_shape=(jax.ShapeDtypeStruct((stats_cores, _SUBLANES, dl), jnp.float32),
                   jax.ShapeDtypeStruct((stats_cores, _SUBLANES, dl), jnp.float32)),
        grid_spec=pltpu.PrefetchScalarGridSpec(
            num_scalar_prefetch=0,
            grid=(stats_cores, tiles_per_core),
            in_specs=[pl.BlockSpec((row_tile, dl),
                                   lambda c, t: (c * tiles_per_core + t, 0))],
            out_specs=(pl.BlockSpec((None, _SUBLANES, dl), lambda c, t: (c, 0, 0)),
                       pl.BlockSpec((None, _SUBLANES, dl), lambda c, t: (c, 0, 0)))),
        compiler_params=pltpu.CompilerParams(
            dimension_semantics=("parallel", "arbitrary")),
    )(xf)

    # Tiny epilogue reductions (cores, sublanes, interleaved lane groups) in JAX.
    b_sum = s_part.sum(axis=(0, 1)).reshape(fold, d).sum(axis=0)
    b_sq = q_part.sum(axis=(0, 1)).reshape(fold, d).sum(axis=0)

    new_sum = r_sum + b_sum
    new_sumsq = r_sumsq + b_sq
    mean = new_sum / new_count
    var = jnp.maximum(new_sumsq / new_count - mean * mean, jnp.float32(EPS * EPS))
    inv_std = jax.lax.rsqrt(var)

    mean_l = jnp.tile(mean, fold).reshape(1, dl).astype(jnp.float32)
    inv_l = jnp.tile(inv_std, fold).reshape(1, dl).astype(jnp.float32)

    # Pass 2: elementwise normalize on lane-dense, big row tiles.
    y_pad = pl.pallas_call(
        _normalize_kernel,
        out_shape=jax.ShapeDtypeStruct((padded_n4, dl), x2d.dtype),
        grid_spec=pltpu.PrefetchScalarGridSpec(
            num_scalar_prefetch=0,
            grid=(total_tiles,),
            in_specs=[pl.BlockSpec((row_tile, dl), lambda t: (t, 0)),
                      pl.BlockSpec((1, dl), lambda t: (0, 0)),
                      pl.BlockSpec((1, dl), lambda t: (0, 0))],
            out_specs=pl.BlockSpec((row_tile, dl), lambda t: (t, 0))),
        compiler_params=pltpu.CompilerParams(
            dimension_semantics=("parallel",)),
    )(xf, mean_l, inv_l)

    y = y_pad.reshape(-1, d)[:n]
    return y, new_sum, new_sumsq


# ---------------------------------------------------------------------------
# Module-level forward.
# ---------------------------------------------------------------------------
def global_normalizer_wgrads_forward(states, history, running_state, *, force_path=None):
    """Returns ((normalized_states, history), new_running_state)."""
    r_sum, r_sumsq, r_count = running_state
    full_shape = states.shape
    d = r_sum.shape[0]
    x2d = states.reshape(-1, d)
    n = x2d.shape[0]
    new_count = r_count + jnp.float32(n)

    fold = _fold_factor(d)
    dl = fold * d
    n4 = -(-n // fold)
    fused_n4 = _round_up(n4, _SUBLANES)
    x_bytes = fused_n4 * dl * 4

    if force_path == "fused":
        use_fused = True
    elif force_path == "two_pass":
        use_fused = False
    else:
        use_fused = x_bytes <= _FUSED_MAX_X_BYTES

    if use_fused:
        y2d, new_sum, new_sumsq = _fused_forward(
            x2d, r_sum, r_sumsq, new_count, fold, dl, fused_n4)
    else:
        y2d, new_sum, new_sumsq = _two_pass_forward(
            x2d, r_sum, r_sumsq, new_count, fold, dl)

    return (y2d.reshape(full_shape), history), (new_sum, new_sumsq, new_count)


def init_normalizer_state(size=STATE_SIZE):
    # Deterministic parameter/state init (no checkpoint loading).
    return (jnp.zeros((size,), jnp.float32),     # running sum
            jnp.zeros((size,), jnp.float32),     # running sum of squares
            jnp.float32(EPS))                    # running count


# ---------------------------------------------------------------------------
# Pure-JAX reference of the same semantics (for correctness checks).
# ---------------------------------------------------------------------------
def _reference_forward(states, running_state):
    r_sum, r_sumsq, r_count = running_state
    d = r_sum.shape[0]
    x = states.reshape(-1, d).astype(jnp.float32)
    ns = r_sum + x.sum(0)
    nq = r_sumsq + (x * x).sum(0)
    nc = r_count + jnp.float32(x.shape[0])
    m = ns / nc
    v = jnp.maximum(nq / nc - m * m, jnp.float32(EPS) ** 2)
    y = jnp.clip((x - m) / jnp.sqrt(v), -CLIP, CLIP).reshape(states.shape)
    return y, (ns, nq, nc)


if __name__ == "__main__":
    key = jax.random.PRNGKey(0)
    k1, k2 = jax.random.split(key)

    fwd = jax.jit(global_normalizer_wgrads_forward, static_argnames=("force_path",))

    # --- small case: fused single-call path ---------------------------------
    B, T = 2, 8
    states = jax.random.normal(k1, (B, T, STATE_SIZE), dtype=jnp.float32) * 3.0 + 1.5
    history = jnp.zeros((B, 1, 1, N_FEATURES), dtype=jnp.float32)
    state0 = init_normalizer_state()

    (out, hist_out), state1 = fwd(states, history, state0)
    out = jax.block_until_ready(out)
    ref_out, ref_state1 = _reference_forward(states, state0)
    assert out.shape == states.shape and hist_out.shape == history.shape
    assert jnp.allclose(out, ref_out, atol=1e-4, rtol=1e-4)
    assert jnp.allclose(state1[0], ref_state1[0], rtol=1e-4, atol=1e-2)
    assert jnp.allclose(state1[1], ref_state1[1], rtol=1e-4, atol=1e-2)
    assert jnp.allclose(state1[2], ref_state1[2])

    # chained call with the updated running stats (checks state accumulation)
    states_b = jax.random.normal(k2, (B, T, STATE_SIZE), dtype=jnp.float32) * 0.5 - 2.0
    (out_b, _), state2 = fwd(states_b, history, state1)
    ref_out_b, _ = _reference_forward(states_b, ref_state1)
    assert jnp.allclose(jax.block_until_ready(out_b), ref_out_b, atol=1e-4, rtol=1e-4)

    # --- medium case: two-pass tiled path (uneven N, exercises padding) -----
    Bm, Tm = 4, 2250   # N = 9000 rows -> multiple row tiles + tail padding
    states_m = jax.random.normal(k2, (Bm, Tm, STATE_SIZE), dtype=jnp.float32) * 2.0 + 0.3
    (out_m, _), _ = fwd(states_m, history, init_normalizer_state(), force_path="two_pass")
    out_m = jax.block_until_ready(out_m)
    ref_m, _ = _reference_forward(states_m, init_normalizer_state())
    assert jnp.allclose(out_m, ref_m, atol=1e-4, rtol=1e-4)

    print("KERNEL_OK")
</pallas_src>

<mosaic_0001>
module attributes {stable_mosaic.version = 11 : i64} {
  func.func @_fused_kernel(%arg0: memref<8x128xf32, #tpu.memory_space<vmem>>, %arg1: memref<1x128xf32, #tpu.memory_space<vmem>>, %arg2: memref<1x128xf32, #tpu.memory_space<vmem>>, %arg3: memref<1xf32, #tpu.memory_space<smem>>, %arg4: memref<8x128xf32, #tpu.memory_space<vmem>>, %arg5: memref<1x128xf32, #tpu.memory_space<vmem>>, %arg6: memref<1x128xf32, #tpu.memory_space<vmem>>) attributes {dimension_semantics = [], scalar_prefetch = 0 : i64, scratch_operands = 0 : i64, tpu.core_type = #tpu.core_type<tc>} {
    %c0 = arith.constant 0 : index
    %c0_0 = arith.constant 0 : index
    %0 = vector.load %arg0[%c0, %c0_0] : memref<8x128xf32, #tpu.memory_space<vmem>>, vector<8x128xf32>
    %1 = vector.shape_cast %0 : vector<8x128xf32> to vector<1x8x128xf32>
    %cst = arith.constant dense<0.000000e+00> : vector<8x128xf32>
    %2 = vector.multi_reduction <add>, %1, %cst [0] : vector<1x8x128xf32> to vector<8x128xf32>
    %3 = arith.mulf %1, %1 : vector<1x8x128xf32>
    %cst_1 = arith.constant dense<0.000000e+00> : vector<8x128xf32>
    %4 = vector.multi_reduction <add>, %3, %cst_1 [0] : vector<1x8x128xf32> to vector<8x128xf32>
    %c32_i32 = arith.constant 32 : i32
    %5 = tpu.dynamic_rotate %2 by %c32_i32 dim 1 : vector<8x128xf32>, i32 -> vector<8x128xf32>
    %6 = arith.addf %2, %5 : vector<8x128xf32>
    %c32_i32_2 = arith.constant 32 : i32
    %7 = tpu.dynamic_rotate %4 by %c32_i32_2 dim 1 : vector<8x128xf32>, i32 -> vector<8x128xf32>
    %8 = arith.addf %4, %7 : vector<8x128xf32>
    %c64_i32 = arith.constant 64 : i32
    %9 = tpu.dynamic_rotate %2 by %c64_i32 dim 1 : vector<8x128xf32>, i32 -> vector<8x128xf32>
    %10 = arith.addf %6, %9 : vector<8x128xf32>
    %c64_i32_3 = arith.constant 64 : i32
    %11 = tpu.dynamic_rotate %4 by %c64_i32_3 dim 1 : vector<8x128xf32>, i32 -> vector<8x128xf32>
    %12 = arith.addf %8, %11 : vector<8x128xf32>
    %c96_i32 = arith.constant 96 : i32
    %13 = tpu.dynamic_rotate %2 by %c96_i32 dim 1 : vector<8x128xf32>, i32 -> vector<8x128xf32>
    %14 = arith.addf %10, %13 : vector<8x128xf32>
    %c96_i32_4 = arith.constant 96 : i32
    %15 = tpu.dynamic_rotate %4 by %c96_i32_4 dim 1 : vector<8x128xf32>, i32 -> vector<8x128xf32>
    %16 = arith.addf %12, %15 : vector<8x128xf32>
    %cst_5 = arith.constant dense<0.000000e+00> : vector<128xf32>
    %17 = vector.multi_reduction <add>, %14, %cst_5 [0] : vector<8x128xf32> to vector<128xf32>
    %18 = vector.shape_cast %17 : vector<128xf32> to vector<1x128xf32>
    %c0_6 = arith.constant 0 : index
    %c0_7 = arith.constant 0 : index
    %19 = vector.load %arg1[%c0_6, %c0_7] : memref<1x128xf32, #tpu.memory_space<vmem>>, vector<1x128xf32>
    %20 = arith.addf %18, %19 : vector<1x128xf32>
    %cst_8 = arith.constant dense<0.000000e+00> : vector<128xf32>
    %21 = vector.multi_reduction <add>, %16, %cst_8 [0] : vector<8x128xf32> to vector<128xf32>
    %22 = vector.shape_cast %21 : vector<128xf32> to vector<1x128xf32>
    %c0_9 = arith.constant 0 : index
    %c0_10 = arith.constant 0 : index
    %23 = vector.load %arg2[%c0_9, %c0_10] : memref<1x128xf32, #tpu.memory_space<vmem>>, vector<1x128xf32>
    %24 = arith.addf %22, %23 : vector<1x128xf32>
    %c0_11 = arith.constant 0 : index
    %25 = memref.load %arg3[%c0_11] : memref<1xf32, #tpu.memory_space<smem>>
    %cst_12 = arith.constant 1.000000e+00 : f32
    %26 = arith.divf %cst_12, %25 : f32
    %27 = vector.broadcast %26 : f32 to vector<1x128xf32>
    %28 = arith.mulf %20, %27 : vector<1x128xf32>
    %29 = vector.broadcast %26 : f32 to vector<1x128xf32>
    %30 = arith.mulf %24, %29 : vector<1x128xf32>
    %31 = arith.mulf %28, %28 : vector<1x128xf32>
    %32 = arith.subf %30, %31 : vector<1x128xf32>
    %cst_13 = arith.constant 9.99999974E-5 : f32
    %33 = vector.broadcast %cst_13 : f32 to vector<1x128xf32>
    %34 = arith.maximumf %32, %33 : vector<1x128xf32>
    %35 = math.rsqrt %34 : vector<1x128xf32>
    %36 = vector.broadcast %28 : vector<1x128xf32> to vector<8x128xf32>
    %37 = arith.subf %0, %36 : vector<8x128xf32>
    %38 = vector.broadcast %35 : vector<1x128xf32> to vector<8x128xf32>
    %39 = arith.mulf %37, %38 : vector<8x128xf32>
    %cst_14 = arith.constant -5.000000e+00 : f32
    %cst_15 = arith.constant 5.000000e+00 : f32
    %40 = vector.broadcast %cst_14 : f32 to vector<8x128xf32>
    %41 = arith.maximumf %40, %39 : vector<8x128xf32>
    %42 = vector.broadcast %cst_15 : f32 to vector<8x128xf32>
    %43 = arith.minimumf %42, %41 : vector<8x128xf32>
    %c0_16 = arith.constant 0 : index
    %c0_17 = arith.constant 0 : index
    %44 = vector.load %arg4[%c0_16, %c0_17] : memref<8x128xf32, #tpu.memory_space<vmem>>, vector<8x128xf32>
    tpu.vector_store %arg4[%c0_16, %c0_17], %43 {strides = array<i32>} : memref<8x128xf32, #tpu.memory_space<vmem>>, vector<8x128xf32>,
    %c0_18 = arith.constant 0 : index
    %c0_19 = arith.constant 0 : index
    %45 = vector.load %arg5[%c0_18, %c0_19] : memref<1x128xf32, #tpu.memory_space<vmem>>, vector<1x128xf32>
    tpu.vector_store %arg5[%c0_18, %c0_19], %20 {strides = array<i32>} : memref<1x128xf32, #tpu.memory_space<vmem>>, vector<1x128xf32>,
    %c0_20 = arith.constant 0 : index
    %c0_21 = arith.constant 0 : index
    %46 = vector.load %arg6[%c0_20, %c0_21] : memref<1x128xf32, #tpu.memory_space<vmem>>, vector<1x128xf32>
    tpu.vector_store %arg6[%c0_20, %c0_21], %24 {strides = array<i32>} : memref<1x128xf32, #tpu.memory_space<vmem>>, vector<1x128xf32>,
    return
  }
}

</mosaic_0001>

<llo_original>
// kernel: tile.14
$region0: #{tile.14}
  %s0 = inlined_call_operand.vmem [shape: f32[4,32], index: 0, kind: input, shape index: {}]
  %s1 = inlined_call_operand.vmem [shape: f32[1,128], index: 1, kind: output, shape index: {}]
  $region1: #{tile.14} parent=0
    #allocation0 [shape = 'u8[4096]{0}', space=vmem, size = 0x1000, scoped, tag = 'scoped mem for output reshape']
    #allocation1 [shape = 'u8[4096]{0}', space=vmem, size = 0x1000, scoped, tag = 'scoped mem for input reshape']
    %s3 = sshll.u32 1, 4
    %s4 = ssub.s32 %s3, 1
    %v5 = vld [vmem:[%s0] sm:%s4]
    %6 = vst [vmem:[#allocation1] sm:%s4] %v5
    %v7 = vld [vmem:[#allocation1] sm:$0x1]
    %vm8 = vcmask 261120
    %9 = vst.msk [vmem:[#allocation0] sm:$0x1] %vm8, %v7
    %s10 = scalar_lea.vmem [#allocation1], 3
    %v11 = vld [vmem:[%s10] sm:$0x1]
    %12 = vrot.lane.b32.xlu0 %v11, 96
    %v13 = vpop.permute.xlu0 %12
    %vm14 = vcmask 1048320
    %15 = vst.msk [vmem:[#allocation0] sm:$0x1] %vm14, %v13
    %s16 = scalar_lea.vmem [#allocation1], 2
    %v17 = vld [vmem:[%s16] sm:$0x1]
    %18 = vrot.lane.b32.xlu0 %v17, 64
    %v19 = vpop.permute.xlu0 %18
    %vm20 = vcmask 785920
    %21 = vst.msk [vmem:[#allocation0] sm:$0x1] %vm20, %v19
    %s22 = scalar_lea.vmem [#allocation1], 1
    %v23 = vld [vmem:[%s22] sm:$0x1]
    %24 = vrot.lane.b32.xlu0 %v23, 32
    %v25 = vpop.permute.xlu0 %24
    %vm26 = vcmask 523520
    %27 = vst.msk [vmem:[#allocation0] sm:$0x1] %vm26, %v25
    %s29 = sshll.u32 1, 1
    %s30 = ssub.s32 %s29, 1
    %v32 = vld [vmem:[#allocation0] sm:%s30]
    %s33 = sshll.u32 1, 1
    %s34 = ssub.s32 %s33, 1
    %35 = vst [vmem:[%s1] sm:%s34] %v32

// kernel: tile.13
$region0: #{tile.13}
  #allocation0 [shape = 's32[1]{0}', space=sflag, size = 0x4, scoped, tag = 'scoped memory for tile.13']
  %s0 = inlined_call_operand.vmem [shape: f32[32], index: 0, kind: input, shape index: {}]
  %s1 = inlined_call_operand.vmem [shape: f32[4,32], index: 1, kind: output, shape index: {}]
  // Predicated region
  $region2: #{tile.13} parent=0 // pred_check
    _
  $region3: #{tile.13} parent=0 // pred_check_branch
    %3 = sbr.rel (0) target = $region5
  $region4: #{tile.13} parent=0 // pred_region
    _
  $region5: #{tile.13} parent=0 // pred_fallthru
    _
  %v4 = vld [vmem:[%s0] ss:$0 sm:$0xff]
  %5 = vst [vmem:[%s1] sm:$0xf] %v4

// kernel: global_normalizer_wgrads_forward.1
$region0: #{global_normalizer_wgrads_forward.1}
  #allocation0 [shape = 'u32[]', space=smem, size = 0x4, offset = 0x4, fixed_abs, tag = 'smem constant byte address 0x4 - core index']
  #allocation1 [shape = 'u32[144,128]{1,0:T(1,128)}', space=vmem, size = 0x12000, scoped, tag = 'internal scratch']
  #allocation2 [shape = 'f32[1]{0:T(128)S(6)}', space=smem, size = 0x200, scoped, tag = 'scoped memory for global_normalizer_wgrads_forward.1']
  %s0 = inlined_call_operand.vmem [shape: f32[8,128], index: 0, kind: input, shape index: {}]
  %s1 = inlined_call_operand.vmem [shape: f32[1,128], index: 1, kind: input, shape index: {}]
  %s2 = inlined_call_operand.vmem [shape: f32[1,128], index: 2, kind: input, shape index: {}]
  %s3 = inlined_call_operand.<no memory space> [shape: f32[1], index: 3, kind: input, shape index: {}]
  %s4 = inlined_call_operand.vmem [shape: f32[8,128], index: 4, kind: output, shape index: {0}]
  %s5 = inlined_call_operand.vmem [shape: f32[1,128], index: 5, kind: output, shape index: {1}]
  %s6 = inlined_call_operand.vmem [shape: f32[1,128], index: 6, kind: output, shape index: {2}]
  %7 = xla_tuple %s4, %s5, %s6
  %s8 = sld [smem:[#allocation0]]
  $region42: #{global_normalizer_wgrads_forward.1} parent=0
    _
  %s10 = ssub.s32 1, %s8
  %s11 = scalar_select 0, %s10, %s8
  %12 = sst [smem:[#allocation2]] %s3
  // Predicated region
  $region2: #{global_normalizer_wgrads_forward.1} parent=0 // pred_check
    _
  $region3: #{global_normalizer_wgrads_forward.1} parent=0 // pred_check_branch
    %14 = sbr.rel (0) target = $region5
  $region4: #{global_normalizer_wgrads_forward.1} parent=0 // pred_region
    _
  $region5: #{global_normalizer_wgrads_forward.1} parent=0 // pred_fallthru
    _
  // Predicated region
  $region6: #{global_normalizer_wgrads_forward.1} parent=0 // pred_check
    _
  $region7: #{global_normalizer_wgrads_forward.1} parent=0 // pred_check_branch
    %16 = sbr.rel (0) target = $region9
  $region8: #{global_normalizer_wgrads_forward.1} parent=0 // pred_region
    _
  $region9: #{global_normalizer_wgrads_forward.1} parent=0 // pred_fallthru
    _
  // Predicated region
  $region10: #{global_normalizer_wgrads_forward.1} parent=0 // pred_check
    _
  $region11: #{global_normalizer_wgrads_forward.1} parent=0 // pred_check_branch
    %18 = sbr.rel (0) target = $region13
  $region12: #{global_normalizer_wgrads_forward.1} parent=0 // pred_region
    _
  $region13: #{global_normalizer_wgrads_forward.1} parent=0 // pred_fallthru
    _
  // Predicated region
  $region14: #{global_normalizer_wgrads_forward.1} parent=0 // pred_check
    _
  $region15: #{global_normalizer_wgrads_forward.1} parent=0 // pred_check_branch
    %20 = sbr.rel (0) target = $region17
  $region16: #{global_normalizer_wgrads_forward.1} parent=0 // pred_region
    _
  $region17: #{global_normalizer_wgrads_forward.1} parent=0 // pred_fallthru
    _
  %v21 = vld [vmem:[%s0] sm:$0xff]
  %v22 = vadd.f32 %v21, 0.0
  %v23 = vmul.f32 %v21, %v21
  %v24 = vadd.f32 %v23, 0.0
  %25 = vrot.lane.b32.xlu0 %v22, 32
  %v26 = vpop.permute.xlu0 %25
  %v27 = vadd.f32 %v22, %v26
  %28 = vrot.lane.b32.xlu0 %v24, 32
  %v29 = vpop.permute.xlu0 %28
  %v30 = vadd.f32 %v24, %v29
  %31 = vrot.lane.b32.xlu0 %v22, 64
  %v32 = vpop.permute.xlu0 %31
  %v33 = vadd.f32 %v27, %v32
  %34 = vrot.lane.b32.xlu0 %v24, 64
  %v35 = vpop.permute.xlu0 %34
  %v36 = vadd.f32 %v30, %v35
  %37 = vrot.lane.b32.xlu0 %v22, 96
  %v38 = vpop.permute.xlu0 %37
  %v39 = vadd.f32 %v33, %v38
  %40 = vrot.lane.b32.xlu0 %v24, 96
  %v41 = vpop.permute.xlu0 %40
  %v42 = vadd.f32 %v36, %v41
  %v43 = vrot.slane %v39, 4
  %v44 = vadd.f32 %v39, %v43
  %v45 = vrot.slane %v44, 2
  %v46 = vadd.f32 %v44, %v45
  %v47 = vrot.slane %v46, 1
  %v48 = vadd.f32 %v46, %v47
  %v49 = vld [vmem:[%s1] sm:$0x1]
  %v50 = vadd.f32 %v48, %v49
  %v51 = vrot.slane %v42, 4
  %v52 = vadd.f32 %v42, %v51
  %v53 = vrot.slane %v52, 2
  %v54 = vadd.f32 %v52, %v53
  %v55 = vrot.slane %v54, 1
  %v56 = vadd.f32 %v54, %v55
  %v57 = vld [vmem:[%s2] sm:$0x1]
  %v58 = vadd.f32 %v56, %v57
  %s59 = sld [smem:[#allocation2]]
  %v60 = vstv %s59
  %v61 = vrcp.pop %v60
  %s62 = vtos %v61
  %v63 = vstv %s62
  %v64 = vmul.f32 %v50, %v63
  %v65 = vmul.f32 %v58, %v63
  %v66 = vmul.f32 %v64, %v64
  %v67 = vsub.f32 %v65, %v66
  %v68 = vmax.f32 %v67, 0.0001
  %v69 = vrsqrt.pop %v68
  %v70 = vlaneseq
  %v71 = vshrl.u32 %v70, 7
  %v72 = vsub.s32 0, %v71
  %v73 = vrot.slane %v64, %v72
  %v74 = vsub.f32 %v21, %v73
  %v75 = vlaneseq
  %v76 = vshrl.u32 %v75, 7
  %v77 = vsub.s32 0, %v76
  %v78 = vrot.slane %v69, %v77
  %v79 = vmul.f32 %v74, %v78
  %v80 = vmax.f32 %v79, -5.0
  %v81 = vmin.f32 %v80, 5.0
  %82 = vst [vmem:[%s4] sm:$0xff] %v81
  %83 = vst [vmem:[%s5] sm:$0x1] %v50
  %84 = vst [vmem:[%s6] sm:$0x1] %v58
  // Predicated region
  $region18: #{global_normalizer_wgrads_forward.1} parent=0 // pred_check
    _
  $region19: #{global_normalizer_wgrads_forward.1} parent=0 // pred_check_branch
    %86 = sbr.rel (0) target = $region21
  $region20: #{global_normalizer_wgrads_forward.1} parent=0 // pred_region
    _
  $region21: #{global_normalizer_wgrads_forward.1} parent=0 // pred_fallthru
    _
  // Predicated region
  $region22: #{global_normalizer_wgrads_forward.1} parent=0 // pred_check
    _
  $region23: #{global_normalizer_wgrads_forward.1} parent=0 // pred_check_branch
    %88 = sbr.rel (0) target = $region25
  $region24: #{global_normalizer_wgrads_forward.1} parent=0 // pred_region
    _
  $region25: #{global_normalizer_wgrads_forward.1} parent=0 // pred_fallthru
    _
  // Predicated region
  $region26: #{global_normalizer_wgrads_forward.1} parent=0 // pred_check
    _
  $region27: #{global_normalizer_wgrads_forward.1} parent=0 // pred_check_branch
    %90 = sbr.rel (0) target = $region29
  $region28: #{global_normalizer_wgrads_forward.1} parent=0 // pred_region
    _
  $region29: #{global_normalizer_wgrads_forward.1} parent=0 // pred_fallthru
    _
  // Predicated region
  $region30: #{global_normalizer_wgrads_forward.1} parent=0 // pred_check
    _
  $region31: #{global_normalizer_wgrads_forward.1} parent=0 // pred_check_branch
    %92 = sbr.rel (0) target = $region33
  $region32: #{global_normalizer_wgrads_forward.1} parent=0 // pred_region
    _
  $region33: #{global_normalizer_wgrads_forward.1} parent=0 // pred_fallthru
    _
  // Predicated region
  $region34: #{global_normalizer_wgrads_forward.1} parent=0 // pred_check
    _
  $region35: #{global_normalizer_wgrads_forward.1} parent=0 // pred_check_branch
    %94 = sbr.rel (0) target = $region37
  $region36: #{global_normalizer_wgrads_forward.1} parent=0 // pred_region
    _
  $region37: #{global_normalizer_wgrads_forward.1} parent=0 // pred_fallthru
    _
  // Predicated region
  $region38: #{global_normalizer_wgrads_forward.1} parent=0 // pred_check
    _
  $region39: #{global_normalizer_wgrads_forward.1} parent=0 // pred_check_branch
    %96 = sbr.rel (0) target = $region41
  $region40: #{global_normalizer_wgrads_forward.1} parent=0 // pred_region
    _
  $region41: #{global_normalizer_wgrads_forward.1} parent=0 // pred_fallthru
    _

</llo_original>
